<compile_context>
chip_gen: v5e
topology: v5e:2x2
jax: 0.10.0
libtpu: 0.0.40
codegen_flags: <defaults>
</compile_context>

<pallas_src>
import functools

import jax
import jax.numpy as jnp
from jax.experimental import pallas as pl
from jax.experimental.pallas import tpu as pltpu


def _concat_pool_kernel(x_ref, out_ref, *, inv_hw):
    """One row tile: per-row spatial max and mean, written lane-dense.

    x_ref:   (tile_rows, H*W) block in VMEM, one row per (n, c) pair.
    out_ref: (2, tile_rows) block; row 0 = max, row 1 = mean (rows on lanes).
    """
    x = x_ref[...]
    mx = jnp.max(x, axis=-1)                          # (tile_rows,) exact, input dtype
    sm = jnp.sum(x.astype(jnp.float32), axis=-1)      # (tile_rows,) f32 accumulation
    av = sm * jnp.float32(inv_hw)                     # mul by precomputed 1/(H*W)
    # TODO(synk): if the XLU reduce slot ever saturates for tiny spatial maps on
    # v7x, move the sum onto the idle MXU (dot with a ones vector) per review.
    out_ref[...] = jnp.concatenate(
        [mx.astype(out_ref.dtype)[None, :], av.astype(out_ref.dtype)[None, :]],
        axis=0,
    )


def _pick_layout(rows, padded_hw, itemsize):
    """Choose (tile_rows, vmem_limit_bytes), aware of the TPU generation."""
    try:
        vmem_cap = pltpu.get_tpu_info().vmem_capacity_bytes
    except Exception:
        vmem_cap = 64 * 1024 * 1024          # unknown -> assume small-VMEM chip (safe)
    if vmem_cap >= 100 * 1024 * 1024:        # v5e / v6e: 128 MiB physical VMEM
        vmem_limit = 64 * 1024 * 1024
        target_buf = 16 * 1024 * 1024        # per input buffer (double-buffered)
    else:                                     # v7x: 64 MiB per TensorCore
        vmem_limit = 40 * 1024 * 1024
        target_buf = 8 * 1024 * 1024
    t = target_buf // max(padded_hw * itemsize, 1)
    t = (t // 128) * 128                      # lane multiple for the (2, tile) output
    t = max(int(t), 128)                      # also a multiple of 8/16/32 sublanes
    if t >= rows:
        return rows, vmem_limit               # single full-dim tile (<= target_buf)
    return t, vmem_limit


def adaptive_concat_pool2d(x, *, tile_rows=None):
    """Pallas AdaptiveConcatPool2d(sz=None): cat([max_pool1(x), avg_pool1(x)], 1).

    x: (N, C, H, W) -> (N, 2*C, 1, 1); channels [0:C]=max, [C:2C]=mean.
    """
    N, C, H, W = x.shape
    rows = N * C
    hw = H * W
    itemsize = jnp.dtype(x.dtype).itemsize

    # One row per (n, c) pair, spatial dims flattened onto the lane axis.
    # TODO(synk): for production 7x7 heads (196 B HBM runs, 49/128 lane occupancy)
    # the remaining win is packing H*W toward 128 at the producer or fusing this
    # pooling into the preceding conv epilogue, not further tuning here.
    x2 = x.reshape(rows, hw)

    # hw is lane-padded to a multiple of 128 in VMEM; size tiles honestly.
    padded_hw = ((hw + 127) // 128) * 128
    auto_tile, vmem_limit = _pick_layout(rows, padded_hw, itemsize)
    if tile_rows is None:
        tile_rows = auto_tile
    num_tiles = pl.cdiv(rows, tile_rows)

    kernel = functools.partial(_concat_pool_kernel, inv_hw=1.0 / float(hw))

    out = pl.pallas_call(
        kernel,
        out_shape=jax.ShapeDtypeStruct((2, rows), x.dtype),
        grid=(num_tiles,),
        in_specs=[pl.BlockSpec((tile_rows, hw), lambda i: (i, 0))],
        out_specs=pl.BlockSpec((2, tile_rows), lambda i: (0, i)),
        compiler_params=pltpu.CompilerParams(
            dimension_semantics=("parallel",),   # independent row tiles -> 2 TCs on v7x
            vmem_limit_bytes=vmem_limit,
        ),
    )(x2)

    mx = out[0].reshape(N, C, 1, 1)
    av = out[1].reshape(N, C, 1, 1)
    # Tiny (N, C)-sized concat left to XLA.
    return jnp.concatenate([mx, av], axis=1)


def _reference(x):
    ref_max = jnp.max(x, axis=(2, 3), keepdims=True)
    ref_avg = jnp.mean(x, axis=(2, 3), keepdims=True)
    return jnp.concatenate([ref_max, ref_avg], axis=1)


if __name__ == "__main__":
    key = jax.random.PRNGKey(0)

    # Small shape consistent with the module (single-tile path).
    x = jax.random.normal(key, (2, 4, 16, 16), dtype=jnp.float32)
    out = jax.block_until_ready(adaptive_concat_pool2d(x))
    ref = _reference(x)
    assert out.shape == (2, 8, 1, 1), out.shape
    assert jnp.allclose(out, ref, atol=1e-5, rtol=1e-5), "mismatch vs reference (16x16)"

    # Typical 7x7 ResNet-head shape: H*W not a multiple of 128, rows not a
    # multiple of 8 (full-dim single tile).
    x2 = jax.random.normal(jax.random.PRNGKey(0), (3, 700, 7, 7), dtype=jnp.float32)
    out2 = jax.block_until_ready(adaptive_concat_pool2d(x2))
    ref2 = _reference(x2)
    assert out2.shape == (3, 1400, 1, 1), out2.shape
    assert jnp.allclose(out2, ref2, atol=1e-5, rtol=1e-5), "mismatch vs reference (7x7)"

    # Force the multi-tile streaming path with a ragged last tile regardless of
    # TPU generation: 600 rows at 128-row tiles -> 5 tiles, last has 88 valid rows.
    x3 = jax.random.normal(jax.random.PRNGKey(0), (2, 300, 16, 16), dtype=jnp.float32)
    out3 = jax.block_until_ready(adaptive_concat_pool2d(x3, tile_rows=128))
    ref3 = _reference(x3)
    assert out3.shape == (2, 600, 1, 1), out3.shape
    assert jnp.allclose(out3, ref3, atol=1e-5, rtol=1e-5), "mismatch vs reference (tiled)"

    print("KERNEL_OK")
</pallas_src>

<mosaic_0001>
module attributes {stable_mosaic.version = 11 : i64} {
  func.func @_concat_pool_kernel(%arg0: i32, %arg1: memref<8x256xf32, #tpu.memory_space<vmem>>, %arg2: memref<2x8xf32, #tpu.memory_space<vmem>>) attributes {dimension_semantics = [#tpu.dimension_semantics<parallel>], iteration_bounds = array<i64: 1>, scalar_prefetch = 0 : i64, scratch_operands = 0 : i64, tpu.core_type = #tpu.core_type<tc>, window_params = [{transform_indices = @transform_0, window_bounds = array<i64: 8, 256>}, {transform_indices = @transform_1, window_bounds = array<i64: 2, 8>}]} {
    %c0 = arith.constant 0 : index
    %c0_0 = arith.constant 0 : index
    %0 = vector.load %arg1[%c0, %c0_0] : memref<8x256xf32, #tpu.memory_space<vmem>>, vector<8x256xf32>
    %cst = arith.constant dense<0xFF800000> : vector<8xf32>
    %1 = vector.multi_reduction <maximumf>, %0, %cst [1] : vector<8x256xf32> to vector<8xf32>
    %cst_1 = arith.constant dense<0.000000e+00> : vector<8xf32>
    %2 = vector.multi_reduction <add>, %0, %cst_1 [1] : vector<8x256xf32> to vector<8xf32>
    %cst_2 = arith.constant 3.906250e-03 : f32
    %3 = vector.broadcast %cst_2 : f32 to vector<8xf32>
    %4 = arith.mulf %2, %3 : vector<8xf32>
    %5 = vector.shape_cast %1 : vector<8xf32> to vector<1x8xf32>
    %6 = vector.shape_cast %4 : vector<8xf32> to vector<1x8xf32>
    %7 = tpu.concatenate %5, %6 in 0 : vector<1x8xf32>, vector<1x8xf32> -> vector<2x8xf32>
    %c0_3 = arith.constant 0 : index
    %c0_4 = arith.constant 0 : index
    %8 = vector.load %arg2[%c0_3, %c0_4] : memref<2x8xf32, #tpu.memory_space<vmem>>, vector<2x8xf32>
    tpu.vector_store %arg2[%c0_3, %c0_4], %7 {strides = array<i32>} : memref<2x8xf32, #tpu.memory_space<vmem>>, vector<2x8xf32>,
    return
  }
  func.func @transform_0(%arg0: i32) -> (i32, i32) {
    %c0_i32 = arith.constant 0 : i32
    %c0_i32_0 = arith.constant 0 : i32
    return %arg0, %c0_i32 : i32, i32
  }
  func.func @transform_1(%arg0: i32) -> (i32, i32) {
    %c0_i32 = arith.constant 0 : i32
    %c0_i32_0 = arith.constant 0 : i32
    return %c0_i32, %arg0 : i32, i32
  }
}

</mosaic_0001>

<llo_original>
// kernel: tpu_custom_call.1
$region0: #{tpu_custom_call.1}
  #allocation0 [shape = 'u32[]', space=smem, size = 0x4, offset = 0x4, fixed_abs, tag = 'smem constant byte address 0x4 - core index']
  #allocation1 [shape = 'u32[72,128]{1,0:T(1,128)}', space=vmem, size = 0x9000, scoped, tag = 'internal scratch']
  %s0 = inlined_call_operand.hbm [shape: f32[8,256], index: 0, kind: input, shape index: {}]
  %s1 = inlined_call_operand.hbm [shape: f32[2,8], index: 1, kind: output, shape index: {}]
  %s2 = sld [smem:[#allocation0]]
  $region18: #{tpu_custom_call.1} parent=0
    _
  %s4 = ssub.s32 1, %s2
  %s5 = scalar_select 0, %s4, %s2
  $region1: #{tpu_custom_call.1} parent=0
    #allocation2 [shape = 'u8[8192]{0}', space=vmem, size = 0x2000, scoped, tag = 'input window, operand 0, single buffered']
    #allocation3 [shape = 's32[1]{0}', space=sflag, size = 0x4, scoped, tag = 'scoped memory for tpu_custom_call.1']
    #allocation4 [shape = 's32[1]{0}', space=sflag, size = 0x4, scoped, tag = 'scoped memory for tpu_custom_call.1']
    #allocation5 [shape = 'u8[1024]{0}', space=vmem, size = 0x400, scoped, tag = 'output window, operand 0, single buffered']
    %6 = vsyncpa [#allocation3], 0
    %7 = vsyncpa [#allocation4], 0
    // Predicated region
    $region2: #{tpu_custom_call.1} parent=1 // pred_check
      _
    $region3: #{tpu_custom_call.1} parent=1 // pred_check_branch
      %9 = sbr.rel (0) target = $region5
    $region4: #{tpu_custom_call.1} parent=1 // pred_region
      %11 = vsyncadd [#allocation3], 0
      %s13 = sshll.u32 %s0, 4
      %s14 = int_to_ptr.hbm [resolvable:$true] %s13
      %s15 = sshll.u32 [#allocation2], 4
      %s16 = int_to_ptr.vmem [resolvable:$true] %s15
      %18 = dma.hbm_to_vmem [thread:$0]  %s14, 256, %s16, [#allocation3]
    $region5: #{tpu_custom_call.1} parent=1 // pred_fallthru
      _
    // Predicated region
    $region6: #{tpu_custom_call.1} parent=1 // pred_check
      _
    $region7: #{tpu_custom_call.1} parent=1 // pred_check_branch
      %20 = sbr.rel (0) target = $region9
    $region8: #{tpu_custom_call.1} parent=1 // pred_region
      %22 = dma.done [#allocation3], 256
    $region9: #{tpu_custom_call.1} parent=1 // pred_fallthru
      _
    %v23 = vld [vmem:[#allocation2] sm:$0xff]
    %v24 = vld [vmem:[#allocation2 + $0x8] sm:$0xff]
    %v25 = vmax.f32 %v23, %v24
    %26 = vmax.xlane.f32.xlu0 %v25
    %v27 = vpop.xlane.xlu0 %26
    %v28 = vadd.f32 %v23, %v24
    %29 = vadd.xlane.f32.xlu0 %v28
    %v30 = vpop.xlane.xlu0 %29
    %v31 = vmul.f32 %v30, 0.00390625
    %v33 = vlaneseq
    %v34 = vand.u32 %v33, 127
    %v35 = vperm.slane %v27, %v34
    %v38 = vperm.slane %v31, %v34
    %vm40 = vcmask 1040384
    %v41 = vsel %vm40, %v35, %v38
    %vm42 = vcmask 58368
    %43 = vst.msk [vmem:[#allocation5] sm:$0x3] %vm42, %v41
    // Predicated region
    $region10: #{tpu_custom_call.1} parent=1 // pred_check
      _
    $region11: #{tpu_custom_call.1} parent=1 // pred_check_branch
      %45 = sbr.rel (0) target = $region13
    $region12: #{tpu_custom_call.1} parent=1 // pred_region
      %47 = vsyncadd [#allocation4], 0
      %s49 = sshll.u32 [#allocation5], 4
      %s50 = int_to_ptr.vmem [resolvable:$true] %s49
      %s51 = sshll.u32 %s1, 4
      %s52 = int_to_ptr.hbm [resolvable:$true] %s51
      %54 = dma.vmem_to_hbm [thread:$0]  %s50, 32, %s52, [#allocation4]
    $region13: #{tpu_custom_call.1} parent=1 // pred_fallthru
      _
    // Predicated region
    $region14: #{tpu_custom_call.1} parent=1 // pred_check
      _
    $region15: #{tpu_custom_call.1} parent=1 // pred_check_branch
      %56 = sbr.rel (0) target = $region17
    $region16: #{tpu_custom_call.1} parent=1 // pred_region
      %58 = dma.done [#allocation4], 32
    $region17: #{tpu_custom_call.1} parent=1 // pred_fallthru
      _
    %59 = vsyncpa [#allocation3], 1
    %60 = vsyncpa [#allocation4], 1

</llo_original>
